<compile_context>
chip_gen: v5e
topology: v5e:2x2
jax: 0.10.0
libtpu: 0.0.40
codegen_flags: <defaults>
</compile_context>

<pallas_src>
import functools

import jax
import jax.numpy as jnp
from jax.experimental import pallas as pl
from jax.experimental.pallas import tpu as pltpu


_NUM_CORES = 2                      # expose a parallel axis for v7x's 2 TCs
_LANE = 128
_MAX_TN = 8192
_VMEM_BUDGET = 12 * 1024 * 1024     # bytes: double-buffered inputs + accumulators
_VMEM_LIMIT = 32 * 1024 * 1024      # <= default/physical scoped VMEM on v5e/v6e/v7x


def _round_up(a, b):
    return -(-a // b) * b


def _dice_sums_kernel(x_ref, y_ref, i_ref, u_ref, acc_i, acc_u):
    k = pl.program_id(1)

    @pl.when(k == 0)
    def _():
        acc_i[...] = jnp.zeros_like(acc_i)
        acc_u[...] = jnp.zeros_like(acc_u)

    # Upcast in VMEM; inputs arrive in their native dtype, accumulate in f32.
    xs = jax.nn.sigmoid(x_ref[...].astype(jnp.float32))
    yv = y_ref[...].astype(jnp.float32)

    # Pure element-wise accumulation in the hot loop (no per-step XLU reduce).
    acc_i[...] += xs * yv
    acc_u[...] += xs + yv

    @pl.when(k == pl.num_programs(1) - 1)
    def _():
        # Single cross-lane reduction per core, hoisted out of the inner loop.
        i_ref[...] = jnp.sum(acc_i[...], axis=1, keepdims=True)[None, :, :]
        u_ref[...] = jnp.sum(acc_u[...], axis=1, keepdims=True)[None, :, :]


def _choose_tiling(B, N, x_itemsize, y_itemsize):
    """Static tiling decisions (all Python ints)."""
    # Densify the sublane dimension when B is small: split each batch row into
    # S contiguous sub-rows so the kernel sees R = B*S >= 8 (16 for 16-bit).
    sub_target = 32 // min(x_itemsize, y_itemsize)      # 8 for f32, 16 for bf16
    S = max(1, -(-sub_target // B))
    R = B * S

    per_row = -(-N // S)                                 # elems per sub-row
    per_core = -(-per_row // _NUM_CORES)

    # VMEM per column of tile: 2 double-buffered inputs + 2 f32 accumulators.
    bytes_per_col = R * (2 * (x_itemsize + y_itemsize) + 2 * 4)
    tn_budget = max(_LANE, (_VMEM_BUDGET // bytes_per_col) // _LANE * _LANE)
    tn = min(_MAX_TN, tn_budget, _round_up(max(per_core, 1), _LANE))
    tn = max(_LANE, tn // _LANE * _LANE)

    steps = max(1, -(-per_row // (_NUM_CORES * tn)))     # reduction steps / core
    M = steps * _NUM_CORES * tn                          # padded sub-row length
    pad = S * M - N                                      # zero pads per batch
    return S, R, tn, steps, M, pad


def _dice_partial_sums(x2d, y2d, R, tn, steps, M):
    """x2d, y2d: (R, M) native dtype. Returns per-row sums (i, u), each (R,) f32."""
    in_spec = pl.BlockSpec((R, tn), lambda p, k: (0, p * steps + k))
    out_spec = pl.BlockSpec((1, R, 1), lambda p, k: (p, 0, 0))

    i_p, u_p = pl.pallas_call(
        _dice_sums_kernel,
        out_shape=(
            jax.ShapeDtypeStruct((_NUM_CORES, R, 1), jnp.float32),
            jax.ShapeDtypeStruct((_NUM_CORES, R, 1), jnp.float32),
        ),
        grid_spec=pltpu.PrefetchScalarGridSpec(
            num_scalar_prefetch=0,
            grid=(_NUM_CORES, steps),
            in_specs=[in_spec, in_spec],
            out_specs=[out_spec, out_spec],
            scratch_shapes=[
                pltpu.VMEM((R, tn), jnp.float32),
                pltpu.VMEM((R, tn), jnp.float32),
            ],
        ),
        compiler_params=pltpu.CompilerParams(
            dimension_semantics=("parallel", "arbitrary"),
            vmem_limit_bytes=_VMEM_LIMIT,
        ),
    )(x2d, y2d)

    i_rows = jnp.sum(i_p, axis=0)[:, 0]   # (R,)
    u_rows = jnp.sum(u_p, axis=0)[:, 0]
    return i_rows, u_rows


@functools.partial(jax.jit, static_argnames=("image",))
def diceloss_g(x, y, *, image=False):
    """Pallas equivalent of PyTorch dicelossg(image=image)(x, y)."""
    B = x.shape[0]
    x2d = x.reshape(B, -1)            # native dtype; kernel upcasts in VMEM
    y2d = y.reshape(B, -1)
    N = x2d.shape[1]

    x_item = jnp.dtype(x.dtype).itemsize
    y_item = jnp.dtype(y.dtype).itemsize
    S, R, tn, steps, M, pad = _choose_tiling(B, N, x_item, y_item)

    if pad > 0:
        x2d = jnp.pad(x2d, ((0, 0), (0, pad)))
        y2d = jnp.pad(y2d, ((0, 0), (0, pad)))
    xr = x2d.reshape(R, M)            # row-major: each batch -> S contiguous rows
    yr = y2d.reshape(R, M)

    i_rows, u_rows = _dice_partial_sums(xr, yr, R, tn, steps, M)

    i_b = i_rows.reshape(B, S).sum(axis=1)                       # (B,)
    # Padded x elements are zero -> sigmoid(0) = 0.5 each; y pads are zero, so
    # only the u sum needs an (exact) correction.
    u_b = u_rows.reshape(B, S).sum(axis=1) - 0.5 * pad           # (B,)

    if image:
        dc = (2.0 * i_b + 1.0) / (u_b + 1.0)
        return 1.0 - jnp.mean(dc)
    i_tot = jnp.sum(i_b)
    u_tot = jnp.sum(u_b)
    return 1.0 - (2.0 * i_tot + 1.0) / (u_tot + 1.0)


def _reference(x, y, *, image=False):
    """Pure-JAX reference mirroring the PyTorch module."""
    xs = jax.nn.sigmoid(x.astype(jnp.float32))
    ya = y.astype(jnp.float32)
    if image:
        i = (xs * ya).reshape(x.shape[0], -1).sum(1)
        u = (xs + ya).reshape(x.shape[0], -1).sum(1)
    else:
        i = (xs * ya).sum()
        u = (xs + ya).sum()
    dc = (2.0 * i + 1.0) / (u + 1.0)
    return 1.0 - jnp.mean(dc)


if __name__ == "__main__":
    key = jax.random.PRNGKey(0)
    kx, ky = jax.random.split(key)

    # Small segmentation-style NCHW input.
    B, C, H, W = 2, 4, 16, 16
    x = jax.random.normal(kx, (B, C, H, W), dtype=jnp.float32)
    y = (jax.random.uniform(ky, (B, C, H, W)) > 0.5).astype(jnp.float32)

    # image=False (module default): global sums.
    out = jax.block_until_ready(diceloss_g(x, y, image=False))
    ref = _reference(x, y, image=False)
    assert jnp.allclose(out, ref, atol=1e-5, rtol=1e-5), (out, ref)

    # image=True: per-image dice, then mean.
    out_img = jax.block_until_ready(diceloss_g(x, y, image=True))
    ref_img = _reference(x, y, image=True)
    assert jnp.allclose(out_img, ref_img, atol=1e-5, rtol=1e-5), (out_img, ref_img)

    # Native-dtype (bf16) path: kernel reads bf16 from HBM, upcasts in VMEM.
    xb = x.astype(jnp.bfloat16)
    yb = y.astype(jnp.bfloat16)
    out_bf = jax.block_until_ready(diceloss_g(xb, yb, image=False))
    ref_bf = _reference(xb, yb, image=False)
    assert jnp.allclose(out_bf, ref_bf, atol=1e-3, rtol=1e-3), (out_bf, ref_bf)

    print("KERNEL_OK")
</pallas_src>

<mosaic_0001>
module attributes {stable_mosaic.version = 11 : i64} {
  func.func @_dice_sums_kernel(%arg0: i32, %arg1: i32, %arg2: memref<8x128xf32, #tpu.memory_space<vmem>>, %arg3: memref<8x128xf32, #tpu.memory_space<vmem>>, %arg4: memref<1x8x1xf32, #tpu.memory_space<vmem>>, %arg5: memref<1x8x1xf32, #tpu.memory_space<vmem>>, %arg6: memref<8x128xf32, #tpu.memory_space<vmem>>, %arg7: memref<8x128xf32, #tpu.memory_space<vmem>>) attributes {dimension_semantics = [#tpu.dimension_semantics<parallel>, #tpu.dimension_semantics<arbitrary>], iteration_bounds = array<i64: 2, 1>, scalar_prefetch = 0 : i64, scratch_operands = 2 : i64, tpu.core_type = #tpu.core_type<tc>, window_params = [{transform_indices = @transform_0, window_bounds = array<i64: 8, 128>}, {transform_indices = @transform_1, window_bounds = array<i64: 8, 128>}, {transform_indices = @transform_2, window_bounds = array<i64: 1, 8, 1>}, {transform_indices = @transform_3, window_bounds = array<i64: 1, 8, 1>}]} {
    %c0_i32 = arith.constant 0 : i32
    %0 = arith.cmpi eq, %arg1, %c0_i32 : i32
    %1 = arith.extui %0 : i1 to i32
    %c0_i32_0 = arith.constant 0 : i32
    %2 = arith.cmpi ne, %1, %c0_i32_0 : i32
    scf.if %2 {
      %cst_14 = arith.constant 0.000000e+00 : f32
      %21 = vector.broadcast %cst_14 : f32 to vector<8x128xf32>
      %c0_15 = arith.constant 0 : index
      %c0_16 = arith.constant 0 : index
      %22 = vector.load %arg6[%c0_15, %c0_16] : memref<8x128xf32, #tpu.memory_space<vmem>>, vector<8x128xf32>
      tpu.vector_store %arg6[%c0_15, %c0_16], %21 {strides = array<i32>} : memref<8x128xf32, #tpu.memory_space<vmem>>, vector<8x128xf32>,
      %cst_17 = arith.constant 0.000000e+00 : f32
      %23 = vector.broadcast %cst_17 : f32 to vector<8x128xf32>
      %c0_18 = arith.constant 0 : index
      %c0_19 = arith.constant 0 : index
      %24 = vector.load %arg7[%c0_18, %c0_19] : memref<8x128xf32, #tpu.memory_space<vmem>>, vector<8x128xf32>
      tpu.vector_store %arg7[%c0_18, %c0_19], %23 {strides = array<i32>} : memref<8x128xf32, #tpu.memory_space<vmem>>, vector<8x128xf32>,
    } else {
    }
    %c0 = arith.constant 0 : index
    %c0_1 = arith.constant 0 : index
    %3 = vector.load %arg2[%c0, %c0_1] : memref<8x128xf32, #tpu.memory_space<vmem>>, vector<8x128xf32>
    %4 = arith.negf %3 : vector<8x128xf32>
    %5 = math.exp %4 : vector<8x128xf32>
    %cst = arith.constant 1.000000e+00 : f32
    %6 = vector.broadcast %cst : f32 to vector<8x128xf32>
    %7 = arith.addf %6, %5 : vector<8x128xf32>
    %8 = arith.divf %6, %7 : vector<8x128xf32>
    %c0_2 = arith.constant 0 : index
    %c0_3 = arith.constant 0 : index
    %9 = vector.load %arg3[%c0_2, %c0_3] : memref<8x128xf32, #tpu.memory_space<vmem>>, vector<8x128xf32>
    %c0_4 = arith.constant 0 : index
    %c0_5 = arith.constant 0 : index
    %10 = vector.load %arg6[%c0_4, %c0_5] : memref<8x128xf32, #tpu.memory_space<vmem>>, vector<8x128xf32>
    %11 = arith.mulf %8, %9 : vector<8x128xf32>
    %12 = arith.addf %10, %11 : vector<8x128xf32>
    %c0_6 = arith.constant 0 : index
    %c0_7 = arith.constant 0 : index
    %13 = vector.load %arg6[%c0_6, %c0_7] : memref<8x128xf32, #tpu.memory_space<vmem>>, vector<8x128xf32>
    tpu.vector_store %arg6[%c0_6, %c0_7], %12 {strides = array<i32>} : memref<8x128xf32, #tpu.memory_space<vmem>>, vector<8x128xf32>,
    %c0_8 = arith.constant 0 : index
    %c0_9 = arith.constant 0 : index
    %14 = vector.load %arg7[%c0_8, %c0_9] : memref<8x128xf32, #tpu.memory_space<vmem>>, vector<8x128xf32>
    %15 = arith.addf %8, %9 : vector<8x128xf32>
    %16 = arith.addf %14, %15 : vector<8x128xf32>
    %c0_10 = arith.constant 0 : index
    %c0_11 = arith.constant 0 : index
    %17 = vector.load %arg7[%c0_10, %c0_11] : memref<8x128xf32, #tpu.memory_space<vmem>>, vector<8x128xf32>
    tpu.vector_store %arg7[%c0_10, %c0_11], %16 {strides = array<i32>} : memref<8x128xf32, #tpu.memory_space<vmem>>, vector<8x128xf32>,
    %c0_i32_12 = arith.constant 0 : i32
    %18 = arith.cmpi eq, %arg1, %c0_i32_12 : i32
    %19 = arith.extui %18 : i1 to i32
    %c0_i32_13 = arith.constant 0 : i32
    %20 = arith.cmpi ne, %19, %c0_i32_13 : i32
    scf.if %20 {
      %c0_14 = arith.constant 0 : index
      %c0_15 = arith.constant 0 : index
      %21 = vector.load %arg6[%c0_14, %c0_15] : memref<8x128xf32, #tpu.memory_space<vmem>>, vector<8x128xf32>
      %cst_16 = arith.constant dense<0.000000e+00> : vector<8xf32>
      %22 = vector.multi_reduction <add>, %21, %cst_16 [1] : vector<8x128xf32> to vector<8xf32>
      %23 = vector.shape_cast %22 : vector<8xf32> to vector<8x1xf32>
      %24 = vector.shape_cast %23 : vector<8x1xf32> to vector<1x8x1xf32>
      %c0_17 = arith.constant 0 : index
      %c0_18 = arith.constant 0 : index
      %c0_19 = arith.constant 0 : index
      %25 = vector.load %arg4[%c0_17, %c0_18, %c0_19] : memref<1x8x1xf32, #tpu.memory_space<vmem>>, vector<1x8x1xf32>
      tpu.vector_store %arg4[%c0_17, %c0_18, %c0_19], %24 {strides = array<i32>} : memref<1x8x1xf32, #tpu.memory_space<vmem>>, vector<1x8x1xf32>,
      %c0_20 = arith.constant 0 : index
      %c0_21 = arith.constant 0 : index
      %26 = vector.load %arg7[%c0_20, %c0_21] : memref<8x128xf32, #tpu.memory_space<vmem>>, vector<8x128xf32>
      %cst_22 = arith.constant dense<0.000000e+00> : vector<8xf32>
      %27 = vector.multi_reduction <add>, %26, %cst_22 [1] : vector<8x128xf32> to vector<8xf32>
      %28 = vector.shape_cast %27 : vector<8xf32> to vector<8x1xf32>
      %29 = vector.shape_cast %28 : vector<8x1xf32> to vector<1x8x1xf32>
      %c0_23 = arith.constant 0 : index
      %c0_24 = arith.constant 0 : index
      %c0_25 = arith.constant 0 : index
      %30 = vector.load %arg5[%c0_23, %c0_24, %c0_25] : memref<1x8x1xf32, #tpu.memory_space<vmem>>, vector<1x8x1xf32>
      tpu.vector_store %arg5[%c0_23, %c0_24, %c0_25], %29 {strides = array<i32>} : memref<1x8x1xf32, #tpu.memory_space<vmem>>, vector<1x8x1xf32>,
    } else {
    }
    return
  }
  func.func @transform_0(%arg0: i32, %arg1: i32) -> (i32, i32) {
    %c1_i32 = arith.constant 1 : i32
    %0 = arith.muli %arg0, %c1_i32 : i32
    %1 = arith.addi %0, %arg1 : i32
    %c0_i32 = arith.constant 0 : i32
    %c0_i32_0 = arith.constant 0 : i32
    return %c0_i32, %1 : i32, i32
  }
  func.func @transform_1(%arg0: i32, %arg1: i32) -> (i32, i32) {
    %c1_i32 = arith.constant 1 : i32
    %0 = arith.muli %arg0, %c1_i32 : i32
    %1 = arith.addi %0, %arg1 : i32
    %c0_i32 = arith.constant 0 : i32
    %c0_i32_0 = arith.constant 0 : i32
    return %c0_i32, %1 : i32, i32
  }
  func.func @transform_2(%arg0: i32, %arg1: i32) -> (i32, i32, i32) {
    %c0_i32 = arith.constant 0 : i32
    %c0_i32_0 = arith.constant 0 : i32
    %c0_i32_1 = arith.constant 0 : i32
    return %arg0, %c0_i32, %c0_i32_0 : i32, i32, i32
  }
  func.func @transform_3(%arg0: i32, %arg1: i32) -> (i32, i32, i32) {
    %c0_i32 = arith.constant 0 : i32
    %c0_i32_0 = arith.constant 0 : i32
    %c0_i32_1 = arith.constant 0 : i32
    return %arg0, %c0_i32, %c0_i32_0 : i32, i32, i32
  }
}

</mosaic_0001>

<llo_original>
// kernel: diceloss_g.1
$region0: #{diceloss_g.1}
  #allocation0 [shape = 'u32[]', space=smem, size = 0x4, offset = 0x4, fixed_abs, tag = 'smem constant byte address 0x4 - core index']
  #allocation1 [shape = 'u32[72,128]{1,0:T(1,128)}', space=vmem, size = 0x9000, scoped, tag = 'internal scratch']
  #allocation2 [shape = 'f32[8,128]{1,0:T(8,128)}', space=vmem, size = 0x1000, scoped, tag = 'scratch operand']
  #allocation3 [shape = 'f32[8,128]{1,0:T(8,128)}', space=vmem, size = 0x1000, scoped, tag = 'scratch operand']
  %s0 = inlined_call_operand.vmem [shape: f32[8,256], index: 0, kind: input, shape index: {}]
  %s1 = inlined_call_operand.vmem [shape: f32[8,256], index: 1, kind: input, shape index: {}]
  %s2 = inlined_call_operand.vmem [shape: f32[2,8,1], index: 2, kind: output, shape index: {0}]
  %s3 = inlined_call_operand.vmem [shape: f32[2,8,1], index: 3, kind: output, shape index: {1}]
  %4 = xla_tuple %s2, %s3
  %s5 = sld [smem:[#allocation0]]
  $region57: #{diceloss_g.1} parent=0
    _
  %s7 = ssub.s32 1, %s5
  %s8 = scalar_select 0, %s7, %s5
  loop: start=0, step=1, limit=4
  $region2: #{diceloss_g.1} parent=0 // loop_pre_header
    _
  $region3: #{diceloss_g.1} parent=0 // loop_header
    %s10 = sphi 0, %s14
    %p11 = scmp.ge.s32.totalorder %s10, 4
    %s17 = sphi 0, %s29
    %s18 = sphi 0, %s25
    %s19 = sphi 0, %s17
    %s20 = sphi 0, %s18
    %s21 = sphi 0, %s19
    %s22 = sphi 0, %s20
    %s34 = sphi 0, %s36
    %s37 = sphi 0, %s34
    %s38 = sphi 0, %s37
    %s54 = sphi 0, %s38
    %s62 = sphi 0, %s64
    %s65 = sphi 0, %s62
    %s66 = sphi 0, %s65
    %s82 = sphi 0, %s66
    %s88 = sphi 0, %s90
    %s91 = sphi 0, %s88
    %s92 = sphi 0, %s91
    %s108 = sphi 0, %s92
    %s114 = sphi 0, %s116
    %s117 = sphi 0, %s114
    %s118 = sphi 0, %s117
    %s134 = sphi 0, %s118
  $region4: #{diceloss_g.1} parent=0 // loop_header_branch
    %13 = sbr.rel (%p11) target = $region8
  $region5: #{diceloss_g.1} parent=0 // loop_body
    %s15 = ssub.s32 %s10, 1
    %s16 = ssub.s32 %s10, 2
    %s23 = sadd.s32 1, %s18
    %p24 = scmp.ge.s32.totalorder %s23, 1
    %s25 = scalar_select %p24, 0, %s23
    %s26 = sadd.s32 1, %s17
    %s27 = scalar_select %p24, %s26, %s17
    %p28 = scmp.ge.s32.totalorder %s27, 2
    %s29 = scalar_select %p28, 0, %s27
    %s30 = sadd.s32 %s17, %s18
    %s31 = sadd.s32 %s29, %s25
    %s32 = ssub.s32 %s30, %s31
    %p33 = scmp.eq.s32.totalorder %s32, 0
    %s35 = sadd.s32 %s34, 1
    %s36 = scalar_select %p33, %s34, %s35
    %p39 = pneg %p33
    %p40 = scmp.eq.s32.totalorder %s10, 1
    %p41 = por %p39, %p40
    %p42 = scmp.ne.s32.totalorder %s34, %s37
    %p43 = scmp.eq.s32.totalorder %s10, 0
    %p44 = por %p42, %p43
    %p45 = scmp.ne.s32.totalorder %s34, %s37
    %p46 = scmp.eq.s32.totalorder %s15, 1
    %p47 = por %p45, %p46
    %p48 = scmp.ne.s32.totalorder %s37, %s38
    %p49 = scmp.eq.s32.totalorder %s15, 0
    %p50 = por %p48, %p49
    %p51 = scmp.ne.s32.totalorder %s37, %s38
    %p52 = scmp.eq.s32.totalorder %s16, 1
    %p53 = por %p51, %p52
    %p55 = scmp.ne.s32.totalorder %s38, %s54
    %p56 = scmp.eq.s32.totalorder %s16, 0
    %p57 = por %p55, %p56
    %s58 = sadd.s32 %s17, %s18
    %s59 = sadd.s32 %s29, %s25
    %s60 = ssub.s32 %s58, %s59
    %p61 = scmp.eq.s32.totalorder %s60, 0
    %s63 = sadd.s32 %s62, 1
    %s64 = scalar_select %p61, %s62, %s63
    %p67 = pneg %p61
    %p68 = scmp.eq.s32.totalorder %s10, 1
    %p69 = por %p67, %p68
    %p70 = scmp.ne.s32.totalorder %s62, %s65
    %p71 = scmp.eq.s32.totalorder %s10, 0
    %p72 = por %p70, %p71
    %p73 = scmp.ne.s32.totalorder %s62, %s65
    %p74 = scmp.eq.s32.totalorder %s15, 1
    %p75 = por %p73, %p74
    %p76 = scmp.ne.s32.totalorder %s65, %s66
    %p77 = scmp.eq.s32.totalorder %s15, 0
    %p78 = por %p76, %p77
    %p79 = scmp.ne.s32.totalorder %s65, %s66
    %p80 = scmp.eq.s32.totalorder %s16, 1
    %p81 = por %p79, %p80
    %p83 = scmp.ne.s32.totalorder %s66, %s82
    %p84 = scmp.eq.s32.totalorder %s16, 0
    %p85 = por %p83, %p84
    %s86 = ssub.s32 %s17, %s29
    %p87 = scmp.eq.s32.totalorder %s86, 0
    %s89 = sadd.s32 %s88, 1
    %s90 = scalar_select %p87, %s88, %s89
    %p93 = pneg %p87
    %p94 = scmp.eq.s32.totalorder %s10, 1
    %p95 = por %p93, %p94
    %p96 = scmp.ne.s32.totalorder %s88, %s91
    %p97 = scmp.eq.s32.totalorder %s10, 0
    %p98 = por %p96, %p97
    %p99 = scmp.ne.s32.totalorder %s88, %s91
    %p100 = scmp.eq.s32.totalorder %s15, 1
    %p101 = por %p99, %p100
    %p102 = scmp.ne.s32.totalorder %s91, %s92
    %p103 = scmp.eq.s32.totalorder %s15, 0
    %p104 = por %p102, %p103
    %p105 = scmp.ne.s32.totalorder %s91, %s92
    %p106 = scmp.eq.s32.totalorder %s16, 1
    %p107 = por %p105, %p106
    %p109 = scmp.ne.s32.totalorder %s92, %s108
    %p110 = scmp.eq.s32.totalorder %s16, 0
    %p111 = por %p109, %p110
    %s112 = ssub.s32 %s17, %s29
    %p113 = scmp.eq.s32.totalorder %s112, 0
    %s115 = sadd.s32 %s114, 1
    %s116 = scalar_select %p113, %s114, %s115
    %p119 = pneg %p113
    %p120 = scmp.eq.s32.totalorder %s10, 1
    %p121 = por %p119, %p120
    %p122 = scmp.ne.s32.totalorder %s114, %s117
    %p123 = scmp.eq.s32.totalorder %s10, 0
    %p124 = por %p122, %p123
    %p125 = scmp.ne.s32.totalorder %s114, %s117
    %p126 = scmp.eq.s32.totalorder %s15, 1
    %p127 = por %p125, %p126
    %p128 = scmp.ne.s32.totalorder %s117, %s118
    %p129 = scmp.eq.s32.totalorder %s15, 0
    %p130 = por %p128, %p129
    %p131 = scmp.ne.s32.totalorder %s117, %s118
    %p132 = scmp.eq.s32.totalorder %s16, 1
    %p133 = por %p131, %p132
    %p135 = scmp.ne.s32.totalorder %s118, %s134
    %p136 = scmp.eq.s32.totalorder %s16, 0
    %p137 = por %p135, %p136
    %p138 = scmp.le.s32.totalorder 1, %s10
    %p139 = scmp.lt.s32.totalorder %s10, 3
    %p140 = pnand %p138, %p139
    %p141 = pneg %p140
    // Predicated region
    $region9: #{diceloss_g.1} parent=5 // pred_check
      _
    $region10: #{diceloss_g.1} parent=5 // pred_check_branch
      %143 = sbr.rel (%p140) target = $region12
    $region11: #{diceloss_g.1} parent=5 // pred_region
      %s144 = ssub.s32 %s10, 1
    $region12: #{diceloss_g.1} parent=5 // pred_fallthru
      _
    %p145 = scmp.lt.s32.totalorder %s10, 2
    // Predicated region
    $region13: #{diceloss_g.1} parent=5 // pred_check
      %p146 = pneg %p145
    $region14: #{diceloss_g.1} parent=5 // pred_check_branch
      %148 = sbr.rel (%p146) target = $region16
    $region15: #{diceloss_g.1} parent=5 // pred_region
      // Predicated region
      $region17: #{diceloss_g.1} parent=15 // pred_check
        %p149 = pneg %p44
      $region18: #{diceloss_g.1} parent=15 // pred_check_branch
        %151 = sbr.rel (%p149) target = $region20
      $region19: #{diceloss_g.1} parent=15 // pred_region
        %s152 = sadd.s32 %s17, %s18
        %p153 = scmp.lt.s32.totalorder %s152, 1
        %s154 = scalar_select %p153, %s152, 1
        %s155 = smul.addr %s154, 8
        %s156 = scalar_lea.vmem %s0, %s155
        %s157 = sadd.s32 %s17, %s18
      $region20: #{diceloss_g.1} parent=15 // pred_fallthru
        _
      // Predicated region
      $region21: #{diceloss_g.1} parent=15 // pred_check
        %p158 = pneg %p72
      $region22: #{diceloss_g.1} parent=15 // pred_check_branch
        %160 = sbr.rel (%p158) target = $region24
      $region23: #{diceloss_g.1} parent=15 // pred_region
        %s161 = sadd.s32 %s17, %s18
        %p162 = scmp.lt.s32.totalorder %s161, 1
        %s163 = scalar_select %p162, %s161, 1
        %s164 = smul.addr %s163, 8
        %s165 = scalar_lea.vmem %s1, %s164
        %s166 = sadd.s32 %s17, %s18
      $region24: #{diceloss_g.1} parent=15 // pred_fallthru
        _
    $region16: #{diceloss_g.1} parent=5 // pred_fallthru
      _
    %p167 = scmp.le.s32.totalorder 1, %s10
    %p168 = scmp.lt.s32.totalorder %s10, 3
    %p169 = pnand %p167, %p168
    %p170 = pneg %p169
    // Predicated region
    $region25: #{diceloss_g.1} parent=5 // pred_check
      _
    $region26: #{diceloss_g.1} parent=5 // pred_check_branch
      %172 = sbr.rel (%p169) target = $region28
    $region27: #{diceloss_g.1} parent=5 // pred_region
      %s173 = ssub.s32 %s10, 1
      %s174 = sadd.s32 %s19, %s20
      %p175 = scmp.lt.s32.totalorder %s174, 1
      %s176 = scalar_select %p175, %s174, 1
      %s177 = smul.addr %s176, 8
      %s178 = scalar_lea.vmem %s0, %s177
      %p179 = pneg %p50
      %p180 = pneg %p47
      %s181 = sadd.s32 %s19, %s20
      %p182 = scmp.lt.s32.totalorder %s181, 1
      %s183 = scalar_select %p182, %s181, 1
      %s184 = smul.addr %s183, 8
      %s185 = scalar_lea.vmem %s1, %s184
      %p186 = pneg %p78
      %p187 = pneg %p75
      %p188 = pneg %p104
      %p189 = pneg %p101
      %p190 = scmp.lt.s32.totalorder %s19, 1
      %s191 = scalar_select %p190, %s19, 1
      %s192 = smul.addr %s191, 8
      %s193 = scalar_lea.vmem %s2, %s192
      %p194 = pneg %p130
      %p195 = pneg %p127
      %p196 = scmp.lt.s32.totalorder %s19, 1
      %s197 = scalar_select %p196, %s19, 1
      %s198 = smul.addr %s197, 8
      %s199 = scalar_lea.vmem %s3, %s198
      %s200 = sadd.s32 %s19, %s20
      %p201 = scmp.lt.s32.totalorder %s200, 1
      %s202 = scalar_select %p201, %s200, 1
      %s203 = smul.addr %s202, 8
      %s204 = scalar_lea.vmem %s0, %s203
      %s205 = sadd.s32 %s19, %s20
      %s206 = sadd.s32 %s19, %s20
      %p207 = scmp.lt.s32.totalorder %s206, 1
      %s208 = scalar_select %p207, %s206, 1
      %s209 = smul.addr %s208, 8
      %s210 = scalar_lea.vmem %s1, %s209
      %s211 = sadd.s32 %s19, %s20
      %p212 = scmp.lt.s32.totalorder %s19, 1
      %s213 = scalar_select %p212, %s19, 1
      %s214 = smul.addr %s213, 8
      %s215 = scalar_lea.vmem %s2, %s214
      %p216 = scmp.lt.s32.totalorder %s19, 1
      %s217 = scalar_select %p216, %s19, 1
      %s218 = smul.addr %s217, 8
      %s219 = scalar_lea.vmem %s3, %s218
      %p220 = scmp.eq.s32.totalorder %s20, 0
      // Predicated region
      $region29: #{diceloss_g.1} parent=27 // pred_check
        %p221 = pneg %p220
      $region30: #{diceloss_g.1} parent=27 // pred_check_branch
        %223 = sbr.rel (%p221) target = $region32
      $region31: #{diceloss_g.1} parent=27 // pred_region
        %224 = vst [vmem:[#allocation2] sm:$0xff] 0.0
        %225 = vst [vmem:[#allocation3] sm:$0xff] 0.0
      $region32: #{diceloss_g.1} parent=27 // pred_fallthru
        _
      %v226 = vld [vmem:[%s204] sm:$0xff]
      %v227 = vxor.u32 %v226, 2147483648
      %v228 = vmul.f32 %v227, 1.442695
      %v229 = vpow.pop %v228
      %v230 = vadd.f32 %v229, 1.0
      %v231 = vrcp.pop %v230
      %v232 = vmul.f32 %v230, %v231
      %v233 = vsub.f32 1.0, %v232
      %v234 = vmul.f32 %v231, %v233
      %v235 = vadd.f32 %v231, %v234
      %vm236 = vweird.f32 %v230
      %vm237 = vweird.f32 %v231
      %vm238 = vmor %vm236, %vm237
      %v239 = vsel %vm238, %v231, %v235
      %v240 = vand.u32 2147483647, %v230
      %vm241 = vcmp.eq.f32.partialorder %v240, 8.507059e+37
      %v242 = vand.u32 %v230, 2147483648
      %v243 = vor.u32 1.1754944e-38, %v242
      %v244 = vsel %vm241, %v243, %v239
      %v245 = vmul.f32 1.0, %v244
      %v246 = vld [vmem:[%s210] sm:$0xff]
      %v247 = vld [vmem:[#allocation2] sm:$0xff]
      %v248 = vmul.f32 %v245, %v246
      %v249 = vadd.f32 %v247, %v248
      %250 = vst [vmem:[#allocation2] sm:$0xff] %v249
      %v251 = vld [vmem:[#allocation3] sm:$0xff]
      %v252 = vadd.f32 %v245, %v246
      %v253 = vadd.f32 %v251, %v252
      %254 = vst [vmem:[#allocation3] sm:$0xff] %v253
      // Predicated region
      $region33: #{diceloss_g.1} parent=27 // pred_check
        %p255 = pneg %p220
      $region34: #{diceloss_g.1} parent=27 // pred_check_branch
        %257 = sbr.rel (%p255) target = $region36
      $region35: #{diceloss_g.1} parent=27 // pred_region
        %v258 = vld [vmem:[#allocation2] sm:$0xff]
        %259 = vadd.xlane.f32.xlu0 %v258
        %v260 = vpop.xlane.xlu0 %259
        %vm261 = vcmask 7168
        %262 = vst.msk [vmem:[%s215] sm:$0xff] %vm261, %v260
        %v263 = vld [vmem:[#allocation3] sm:$0xff]
        %264 = vadd.xlane.f32.xlu0 %v263
        %v265 = vpop.xlane.xlu0 %264
        %266 = vst.msk [vmem:[%s219] sm:$0xff] %vm261, %v265
      $region36: #{diceloss_g.1} parent=27 // pred_fallthru
        _
      %p267 = scmp.lt.s32.totalorder %s19, 1
      %s268 = scalar_select %p267, %s19, 1
      %s269 = smul.addr %s268, 8
      %s270 = scalar_lea.vmem %s2, %s269
      %p271 = scmp.lt.s32.totalorder %s19, 1
      %s272 = scalar_select %p271, %s19, 1
      %s273 = smul.addr %s272, 8
      %s274 = scalar_lea.vmem %s3, %s273
      // Predicated region
      $region37: #{diceloss_g.1} parent=27 // pred_check
        %p275 = pneg %p101
      $region38: #{diceloss_g.1} parent=27 // pred_check_branch
        %277 = sbr.rel (%p275) target = $region40
      $region39: #{diceloss_g.1} parent=27 // pred_region
        _
      $region40: #{diceloss_g.1} parent=27 // pred_fallthru
        _
      // Predicated region
      $region41: #{diceloss_g.1} parent=27 // pred_check
        %p278 = pneg %p127
      $region42: #{diceloss_g.1} parent=27 // pred_check_branch
        %280 = sbr.rel (%p278) target = $region44
      $region43: #{diceloss_g.1} parent=27 // pred_region
        _
      $region44: #{diceloss_g.1} parent=27 // pred_fallthru
        _
    $region28: #{diceloss_g.1} parent=5 // pred_fallthru
      _
    %p281 = scmp.le.s32.totalorder 2, %s10
    // Predicated region
    $region45: #{diceloss_g.1} parent=5 // pred_check
      %p282 = pneg %p281
    $region46: #{diceloss_g.1} parent=5 // pred_check_branch
      %284 = sbr.rel (%p282) target = $region48
    $region47: #{diceloss_g.1} parent=5 // pred_region
      %s285 = ssub.s32 %s10, 2
      // Predicated region
      $region49: #{diceloss_g.1} parent=47 // pred_check
        %p286 = pneg %p107
      $region50: #{diceloss_g.1} parent=47 // pred_check_branch
        %288 = sbr.rel (%p286) target = $region52
      $region51: #{diceloss_g.1} parent=47 // pred_region
        %p289 = scmp.lt.s32.totalorder %s21, 1
        %s290 = scalar_select %p289, %s21, 1
        %s291 = smul.addr %s290, 8
        %s292 = scalar_lea.vmem %s2, %s291
      $region52: #{diceloss_g.1} parent=47 // pred_fallthru
        _
      // Predicated region
      $region53: #{diceloss_g.1} parent=47 // pred_check
        %p293 = pneg %p133
      $region54: #{diceloss_g.1} parent=47 // pred_check_branch
        %295 = sbr.rel (%p293) target = $region56
      $region55: #{diceloss_g.1} parent=47 // pred_region
        %p296 = scmp.lt.s32.totalorder %s21, 1
        %s297 = scalar_select %p296, %s21, 1
        %s298 = smul.addr %s297, 8
        %s299 = scalar_lea.vmem %s3, %s298
      $region56: #{diceloss_g.1} parent=47 // pred_fallthru
        _
    $region48: #{diceloss_g.1} parent=5 // pred_fallthru
      _
  $region6: #{diceloss_g.1} parent=0 // loop_footer
    %s14 = sadd.s32 1, %s10
  $region7: #{diceloss_g.1} parent=0 // loop_footer_branch
    %9 = sbr.rel target = $region3
  $region8: #{diceloss_g.1} parent=0 // loop_exit
    _

</llo_original>
